<compile_context>
chip_gen: v5e
topology: v5e:2x2
jax: 0.10.0
libtpu: 0.0.40
codegen_flags: <defaults>
</compile_context>

<pallas_src>
import functools
import math

import jax
import jax.numpy as jnp
from jax.experimental import pallas as pl
from jax.experimental.pallas import tpu as pltpu


def sdpa_kernel(*refs, sm_scale, has_mask):
    if has_mask:
        q_ref, k_ref, v_ref, m_ref, o_ref, a_ref = refs
    else:
        q_ref, k_ref, v_ref, o_ref, a_ref = refs
        m_ref = None

    q = q_ref[...].astype(jnp.float32)          # (tq, D)
    k = k_ref[...].astype(jnp.float32)          # (Tk, D)

    # scores = q @ k^T   (contract the feature dim of both -> (tq, Tk))
    s = jax.lax.dot_general(q, k, (((1,), (1,)), ((), ())),
                            preferred_element_type=jnp.float32)
    s = s * sm_scale

    if m_ref is not None:
        # masked_fill(mask, -1e9): mask passed as float32 (1.0 == masked)
        s = jnp.where(m_ref[...] > 0, jnp.float32(-1e9), s)

    # softmax along the key axis (dim=2 of the original (B, Tq, Tk) tensor)
    s_max = jnp.max(s, axis=-1, keepdims=True)
    p = jnp.exp(s - s_max)
    denom = jnp.sum(p, axis=-1, keepdims=True)
    attn = p / denom

    a_ref[...] = attn.astype(a_ref.dtype)
    o_ref[...] = jnp.dot(attn, v_ref[...].astype(jnp.float32),
                         preferred_element_type=jnp.float32).astype(o_ref.dtype)


@functools.partial(jax.jit, static_argnames=("scale", "tile_q"))
def sdpa_pallas(q, k, v, mask=None, *, scale=True, tile_q=128):
    """q: [B, Tq, D], k: [B, Tk, D], v: [B, Tk, Dv], mask: [B, Tq, Tk] or None.

    Returns (output [B, Tq, Dv], attn [B, Tq, Tk])."""
    B, Tq, D = q.shape
    _, Tk, Dv = v.shape
    assert k.shape == (B, Tk, D)

    sm_scale = (1.0 / math.sqrt(D)) if scale else 1.0
    has_mask = mask is not None
    if has_mask:
        mask = mask.astype(jnp.float32)

    # Pad the query axis to a multiple of the tile; padded rows are sliced off.
    tq = min(tile_q, Tq)
    tq_grid = pl.cdiv(Tq, tq)
    Tq_pad = tq_grid * tq
    if Tq_pad != Tq:
        q = jnp.pad(q, ((0, 0), (0, Tq_pad - Tq), (0, 0)))
        if has_mask:
            mask = jnp.pad(mask, ((0, 0), (0, Tq_pad - Tq), (0, 0)))

    grid = (B, tq_grid)

    in_specs = [
        pl.BlockSpec((None, tq, D), lambda b, i: (b, i, 0)),    # q tile
        pl.BlockSpec((None, Tk, D), lambda b, i: (b, 0, 0)),    # full k for batch b
        pl.BlockSpec((None, Tk, Dv), lambda b, i: (b, 0, 0)),   # full v for batch b
    ]
    inputs = [q, k, v]
    if has_mask:
        in_specs.append(pl.BlockSpec((None, tq, Tk), lambda b, i: (b, i, 0)))
        inputs.append(mask)

    out_shape = (jax.ShapeDtypeStruct((B, Tq_pad, Dv), q.dtype),
                 jax.ShapeDtypeStruct((B, Tq_pad, Tk), q.dtype))
    out_specs = (pl.BlockSpec((None, tq, Dv), lambda b, i: (b, i, 0)),
                 pl.BlockSpec((None, tq, Tk), lambda b, i: (b, i, 0)))

    bytes_in = sum(int(a.size) * a.dtype.itemsize for a in inputs)
    bytes_out = (B * Tq_pad * Dv + B * Tq_pad * Tk) * q.dtype.itemsize
    cost = pl.CostEstimate(
        flops=2 * B * Tq_pad * Tk * (D + Dv),
        transcendentals=B * Tq_pad * Tk,
        bytes_accessed=bytes_in + bytes_out,
    )

    kernel = functools.partial(sdpa_kernel, sm_scale=sm_scale, has_mask=has_mask)

    out, attn = pl.pallas_call(
        kernel,
        out_shape=out_shape,
        grid_spec=pltpu.PrefetchScalarGridSpec(
            num_scalar_prefetch=0,
            grid=grid,
            in_specs=in_specs,
            out_specs=out_specs,
        ),
        compiler_params=pltpu.CompilerParams(
            dimension_semantics=("parallel", "parallel")),
        cost_estimate=cost,
    )(*inputs)

    if Tq_pad != Tq:
        out = out[:, :Tq, :]
        attn = attn[:, :Tq, :]
    return out, attn


def sdpa_reference(q, k, v, mask=None, scale=True):
    """Pure-JAX mirror of the PyTorch forward (eval mode)."""
    attn = jnp.einsum('bqd,bkd->bqk', q, k)
    if scale:
        attn = attn / jnp.sqrt(jnp.asarray(k.shape[-1], attn.dtype))
    if mask is not None:
        attn = jnp.where(mask, jnp.asarray(-1e9, attn.dtype), attn)
    attn = jax.nn.softmax(attn, axis=-1)
    out = jnp.einsum('bqk,bkv->bqv', attn, v)
    return out, attn


if __name__ == "__main__":
    batch, seq, d_k, d_v = 2, 128, 32, 32

    key = jax.random.PRNGKey(0)
    kq, kk, kv = jax.random.split(key, 3)
    q = jax.random.normal(kq, (batch, seq, d_k), jnp.float32)
    k = jax.random.normal(kk, (batch, seq, d_k), jnp.float32)
    v = jax.random.normal(kv, (batch, seq, d_v), jnp.float32)

    # --- mask=None path (module default call) ---
    out, attn = sdpa_pallas(q, k, v, scale=True, tile_q=128)
    out = jax.block_until_ready(out)
    attn = jax.block_until_ready(attn)
    out_ref, attn_ref = sdpa_reference(q, k, v, scale=True)
    assert jnp.allclose(out, out_ref, atol=1e-4, rtol=1e-4), "output mismatch (no mask)"
    assert jnp.allclose(attn, attn_ref, atol=1e-5, rtol=1e-4), "attn mismatch (no mask)"

    # --- masked path (causal mask: hide strictly-future keys) ---
    causal = jnp.triu(jnp.ones((seq, seq), jnp.bool_), k=1)
    mask = jnp.broadcast_to(causal, (batch, seq, seq))
    out_m, attn_m = sdpa_pallas(q, k, v, mask, scale=True, tile_q=128)
    out_m = jax.block_until_ready(out_m)
    attn_m = jax.block_until_ready(attn_m)
    out_mr, attn_mr = sdpa_reference(q, k, v, mask, scale=True)
    assert jnp.allclose(out_m, out_mr, atol=1e-4, rtol=1e-4), "output mismatch (mask)"
    assert jnp.allclose(attn_m, attn_mr, atol=1e-5, rtol=1e-4), "attn mismatch (mask)"

    print("KERNEL_OK")
</pallas_src>

<mosaic_0001>
module attributes {stable_mosaic.version = 11 : i64} {
  func.func @sdpa_kernel(%arg0: i32, %arg1: i32, %arg2: memref<1x128x32xf32, #tpu.memory_space<vmem>>, %arg3: memref<1x128x32xf32, #tpu.memory_space<vmem>>, %arg4: memref<1x128x32xf32, #tpu.memory_space<vmem>>, %arg5: memref<1x128x32xf32, #tpu.memory_space<vmem>>, %arg6: memref<1x128x128xf32, #tpu.memory_space<vmem>>) attributes {dimension_semantics = [#tpu.dimension_semantics<parallel>, #tpu.dimension_semantics<parallel>], iteration_bounds = array<i64: 2, 1>, scalar_prefetch = 0 : i64, scratch_operands = 0 : i64, tpu.core_type = #tpu.core_type<tc>, window_params = [{transform_indices = @transform_0, window_bounds = array<i64: 1, 128, 32>}, {transform_indices = @transform_1, window_bounds = array<i64: 1, 128, 32>}, {transform_indices = @transform_2, window_bounds = array<i64: 1, 128, 32>}, {transform_indices = @transform_3, window_bounds = array<i64: 1, 128, 32>}, {transform_indices = @transform_4, window_bounds = array<i64: 1, 128, 128>}]} {
    %c0 = arith.constant 0 : index
    %c0_0 = arith.constant 0 : index
    %c0_1 = arith.constant 0 : index
    %0 = vector.load %arg2[%c0, %c0_0, %c0_1] : memref<1x128x32xf32, #tpu.memory_space<vmem>>, vector<1x128x32xf32>
    %1 = vector.shape_cast %0 : vector<1x128x32xf32> to vector<128x32xf32>
    %c0_2 = arith.constant 0 : index
    %c0_3 = arith.constant 0 : index
    %c0_4 = arith.constant 0 : index
    %2 = vector.load %arg3[%c0_2, %c0_3, %c0_4] : memref<1x128x32xf32, #tpu.memory_space<vmem>>, vector<1x128x32xf32>
    %3 = vector.shape_cast %2 : vector<1x128x32xf32> to vector<128x32xf32>
    %cst = arith.constant dense<0.000000e+00> : vector<128x128xf32>
    %4 = tpu.matmul %1, %3, %cst {dimension_numbers = #tpu.dot_dimension_numbers<[1], [1], [0], [0], [0, 0, 1, 0], [], []>} : vector<128x32xf32>, vector<128x32xf32>, vector<128x128xf32> -> vector<128x128xf32>
    %cst_5 = arith.constant 0.176776692 : f32
    %5 = vector.broadcast %cst_5 : f32 to vector<128x128xf32>
    %6 = arith.mulf %4, %5 : vector<128x128xf32>
    %cst_6 = arith.constant dense<0xFF800000> : vector<128xf32>
    %7 = vector.multi_reduction <maximumf>, %6, %cst_6 [1] : vector<128x128xf32> to vector<128xf32>
    %8 = vector.shape_cast %7 : vector<128xf32> to vector<128x1xf32>
    %9 = vector.broadcast %8 : vector<128x1xf32> to vector<128x128xf32>
    %10 = arith.subf %6, %9 : vector<128x128xf32>
    %11 = math.exp %10 : vector<128x128xf32>
    %cst_7 = arith.constant dense<0.000000e+00> : vector<128xf32>
    %12 = vector.multi_reduction <add>, %11, %cst_7 [1] : vector<128x128xf32> to vector<128xf32>
    %13 = vector.shape_cast %12 : vector<128xf32> to vector<128x1xf32>
    %14 = vector.broadcast %13 : vector<128x1xf32> to vector<128x128xf32>
    %15 = arith.divf %11, %14 : vector<128x128xf32>
    %c0_8 = arith.constant 0 : index
    %c0_9 = arith.constant 0 : index
    %c0_10 = arith.constant 0 : index
    %16 = vector.load %arg6[%c0_8, %c0_9, %c0_10] : memref<1x128x128xf32, #tpu.memory_space<vmem>>, vector<1x128x128xf32>
    %17 = vector.shape_cast %16 : vector<1x128x128xf32> to vector<128x128xf32>
    %18 = vector.shape_cast %15 : vector<128x128xf32> to vector<1x128x128xf32>
    tpu.vector_store %arg6[%c0_8, %c0_9, %c0_10], %18 {strides = array<i32>} : memref<1x128x128xf32, #tpu.memory_space<vmem>>, vector<1x128x128xf32>,
    %c0_11 = arith.constant 0 : index
    %c0_12 = arith.constant 0 : index
    %c0_13 = arith.constant 0 : index
    %19 = vector.load %arg4[%c0_11, %c0_12, %c0_13] : memref<1x128x32xf32, #tpu.memory_space<vmem>>, vector<1x128x32xf32>
    %20 = vector.shape_cast %19 : vector<1x128x32xf32> to vector<128x32xf32>
    %cst_14 = arith.constant dense<0.000000e+00> : vector<128x32xf32>
    %21 = tpu.matmul %15, %20, %cst_14 {dimension_numbers = #tpu.dot_dimension_numbers<[1], [0], [0], [1], [0, 0, 1, 1], [], []>} : vector<128x128xf32>, vector<128x32xf32>, vector<128x32xf32> -> vector<128x32xf32>
    %c0_15 = arith.constant 0 : index
    %c0_16 = arith.constant 0 : index
    %c0_17 = arith.constant 0 : index
    %22 = vector.load %arg5[%c0_15, %c0_16, %c0_17] : memref<1x128x32xf32, #tpu.memory_space<vmem>>, vector<1x128x32xf32>
    %23 = vector.shape_cast %22 : vector<1x128x32xf32> to vector<128x32xf32>
    %24 = vector.shape_cast %21 : vector<128x32xf32> to vector<1x128x32xf32>
    tpu.vector_store %arg5[%c0_15, %c0_16, %c0_17], %24 {strides = array<i32>} : memref<1x128x32xf32, #tpu.memory_space<vmem>>, vector<1x128x32xf32>,
    return
  }
  func.func @transform_0(%arg0: i32, %arg1: i32) -> (i32, i32, i32) {
    %c0_i32 = arith.constant 0 : i32
    %c0_i32_0 = arith.constant 0 : i32
    return %arg0, %arg1, %c0_i32 : i32, i32, i32
  }
  func.func @transform_1(%arg0: i32, %arg1: i32) -> (i32, i32, i32) {
    %c0_i32 = arith.constant 0 : i32
    %c0_i32_0 = arith.constant 0 : i32
    %c0_i32_1 = arith.constant 0 : i32
    return %arg0, %c0_i32, %c0_i32_0 : i32, i32, i32
  }
  func.func @transform_2(%arg0: i32, %arg1: i32) -> (i32, i32, i32) {
    %c0_i32 = arith.constant 0 : i32
    %c0_i32_0 = arith.constant 0 : i32
    %c0_i32_1 = arith.constant 0 : i32
    return %arg0, %c0_i32, %c0_i32_0 : i32, i32, i32
  }
  func.func @transform_3(%arg0: i32, %arg1: i32) -> (i32, i32, i32) {
    %c0_i32 = arith.constant 0 : i32
    %c0_i32_0 = arith.constant 0 : i32
    return %arg0, %arg1, %c0_i32 : i32, i32, i32
  }
  func.func @transform_4(%arg0: i32, %arg1: i32) -> (i32, i32, i32) {
    %c0_i32 = arith.constant 0 : i32
    %c0_i32_0 = arith.constant 0 : i32
    return %arg0, %arg1, %c0_i32 : i32, i32, i32
  }
}

</mosaic_0001>

<llo_original>
// kernel: sdpa_pallas.1
$region0: #{sdpa_pallas.1}
  #allocation0 [shape = 'u32[]', space=smem, size = 0x4, offset = 0x4, fixed_abs, tag = 'smem constant byte address 0x4 - core index']
  #allocation1 [shape = 'u32[72,128]{1,0:T(1,128)}', space=vmem, size = 0x9000, scoped, tag = 'internal scratch']
  %s0 = inlined_call_operand.vmem [shape: f32[2,128,32], index: 0, kind: input, shape index: {}]
  %s1 = inlined_call_operand.vmem [shape: f32[2,128,32], index: 1, kind: input, shape index: {}]
  %s2 = inlined_call_operand.vmem [shape: f32[2,128,32], index: 2, kind: input, shape index: {}]
  %s3 = inlined_call_operand.vmem [shape: f32[2,128,32], index: 3, kind: output, shape index: {0}]
  %s4 = inlined_call_operand.hbm [shape: f32[2,128,128], index: 4, kind: output, shape index: {1}]
  %5 = xla_tuple %s3, %s4
  %s6 = sld [smem:[#allocation0]]
  $region53: #{sdpa_pallas.1} parent=0
    _
  %s8 = ssub.s32 1, %s6
  %s9 = scalar_select 0, %s8, %s6
  $region1: #{sdpa_pallas.1} parent=0
    #allocation2 [shape = 'u8[131072]{0}', space=vmem, size = 0x20000, scoped, tag = 'output window, operand 1']
    #allocation3 [shape = 's32[2]{0}', space=sflag, size = 0x8, scoped, tag = 'scoped memory for sdpa_pallas.1']
    %10 = vsyncpa [#allocation3], 0
    %s11 = scalar_lea.sflag [#allocation3], 1
    %12 = vsyncpa %s11, 0
    loop: start=0, step=1, limit=4
    $region2: #{sdpa_pallas.1} parent=1 // loop_pre_header
      _
    $region3: #{sdpa_pallas.1} parent=1 // loop_header
      %s14 = sphi 0, %s18
      %p15 = scmp.ge.s32.totalorder %s14, 4
      %s21 = sphi 0, %s33
      %s22 = sphi 0, %s29
      %s23 = sphi 0, %s21
      %s24 = sphi 0, %s22
      %s25 = sphi 0, %s23
      %s26 = sphi 0, %s24
      %s38 = sphi 0, %s40
      %s41 = sphi 0, %s38
      %s42 = sphi 0, %s41
      %s58 = sphi 0, %s42
      %s64 = sphi 0, %s66
      %s67 = sphi 0, %s64
      %s68 = sphi 0, %s67
      %s84 = sphi 0, %s68
      %s90 = sphi 0, %s92
      %s93 = sphi 0, %s90
      %s94 = sphi 0, %s93
      %s110 = sphi 0, %s94
      %s118 = sphi 0, %s120
      %s121 = sphi 0, %s118
      %s122 = sphi 0, %s121
      %s138 = sphi 0, %s122
      %s146 = sphi 0, %s148
      %s149 = sphi 0, %s146
      %s150 = sphi 0, %s149
      %s166 = sphi 0, %s150
    $region4: #{sdpa_pallas.1} parent=1 // loop_header_branch
      %17 = sbr.rel (%p15) target = $region8
    $region5: #{sdpa_pallas.1} parent=1 // loop_body
      %s19 = ssub.s32 %s14, 1
      %s20 = ssub.s32 %s14, 2
      %s27 = sadd.s32 1, %s22
      %p28 = scmp.ge.s32.totalorder %s27, 1
      %s29 = scalar_select %p28, 0, %s27
      %s30 = sadd.s32 1, %s21
      %s31 = scalar_select %p28, %s30, %s21
      %p32 = scmp.ge.s32.totalorder %s31, 2
      %s33 = scalar_select %p32, 0, %s31
      %s34 = ssub.s32 %s21, %s33
      %s35 = ssub.s32 %s22, %s29
      %s36 = sor.u32 %s34, %s35
      %p37 = scmp.eq.s32.totalorder %s36, 0
      %s39 = sadd.s32 %s38, 1
      %s40 = scalar_select %p37, %s38, %s39
      %p43 = pneg %p37
      %p44 = scmp.eq.s32.totalorder %s14, 1
      %p45 = por %p43, %p44
      %p46 = scmp.ne.s32.totalorder %s38, %s41
      %p47 = scmp.eq.s32.totalorder %s14, 0
      %p48 = por %p46, %p47
      %p49 = scmp.ne.s32.totalorder %s38, %s41
      %p50 = scmp.eq.s32.totalorder %s19, 1
      %p51 = por %p49, %p50
      %p52 = scmp.ne.s32.totalorder %s41, %s42
      %p53 = scmp.eq.s32.totalorder %s19, 0
      %p54 = por %p52, %p53
      %p55 = scmp.ne.s32.totalorder %s41, %s42
      %p56 = scmp.eq.s32.totalorder %s20, 1
      %p57 = por %p55, %p56
      %p59 = scmp.ne.s32.totalorder %s42, %s58
      %p60 = scmp.eq.s32.totalorder %s20, 0
      %p61 = por %p59, %p60
      %s62 = ssub.s32 %s21, %s33
      %p63 = scmp.eq.s32.totalorder %s62, 0
      %s65 = sadd.s32 %s64, 1
      %s66 = scalar_select %p63, %s64, %s65
      %p69 = pneg %p63
      %p70 = scmp.eq.s32.totalorder %s14, 1
      %p71 = por %p69, %p70
      %p72 = scmp.ne.s32.totalorder %s64, %s67
      %p73 = scmp.eq.s32.totalorder %s14, 0
      %p74 = por %p72, %p73
      %p75 = scmp.ne.s32.totalorder %s64, %s67
      %p76 = scmp.eq.s32.totalorder %s19, 1
      %p77 = por %p75, %p76
      %p78 = scmp.ne.s32.totalorder %s67, %s68
      %p79 = scmp.eq.s32.totalorder %s19, 0
      %p80 = por %p78, %p79
      %p81 = scmp.ne.s32.totalorder %s67, %s68
      %p82 = scmp.eq.s32.totalorder %s20, 1
      %p83 = por %p81, %p82
      %p85 = scmp.ne.s32.totalorder %s68, %s84
      %p86 = scmp.eq.s32.totalorder %s20, 0
      %p87 = por %p85, %p86
      %s88 = ssub.s32 %s21, %s33
      %p89 = scmp.eq.s32.totalorder %s88, 0
      %s91 = sadd.s32 %s90, 1
      %s92 = scalar_select %p89, %s90, %s91
      %p95 = pneg %p89
      %p96 = scmp.eq.s32.totalorder %s14, 1
      %p97 = por %p95, %p96
      %p98 = scmp.ne.s32.totalorder %s90, %s93
      %p99 = scmp.eq.s32.totalorder %s14, 0
      %p100 = por %p98, %p99
      %p101 = scmp.ne.s32.totalorder %s90, %s93
      %p102 = scmp.eq.s32.totalorder %s19, 1
      %p103 = por %p101, %p102
      %p104 = scmp.ne.s32.totalorder %s93, %s94
      %p105 = scmp.eq.s32.totalorder %s19, 0
      %p106 = por %p104, %p105
      %p107 = scmp.ne.s32.totalorder %s93, %s94
      %p108 = scmp.eq.s32.totalorder %s20, 1
      %p109 = por %p107, %p108
      %p111 = scmp.ne.s32.totalorder %s94, %s110
      %p112 = scmp.eq.s32.totalorder %s20, 0
      %p113 = por %p111, %p112
      %s114 = ssub.s32 %s21, %s33
      %s115 = ssub.s32 %s22, %s29
      %s116 = sor.u32 %s114, %s115
      %p117 = scmp.eq.s32.totalorder %s116, 0
      %s119 = sadd.s32 %s118, 1
      %s120 = scalar_select %p117, %s118, %s119
      %p123 = pneg %p117
      %p124 = scmp.eq.s32.totalorder %s14, 1
      %p125 = por %p123, %p124
      %p126 = scmp.ne.s32.totalorder %s118, %s121
      %p127 = scmp.eq.s32.totalorder %s14, 0
      %p128 = por %p126, %p127
      %p129 = scmp.ne.s32.totalorder %s118, %s121
      %p130 = scmp.eq.s32.totalorder %s19, 1
      %p131 = por %p129, %p130
      %p132 = scmp.ne.s32.totalorder %s121, %s122
      %p133 = scmp.eq.s32.totalorder %s19, 0
      %p134 = por %p132, %p133
      %p135 = scmp.ne.s32.totalorder %s121, %s122
      %p136 = scmp.eq.s32.totalorder %s20, 1
      %p137 = por %p135, %p136
      %p139 = scmp.ne.s32.totalorder %s122, %s138
      %p140 = scmp.eq.s32.totalorder %s20, 0
      %p141 = por %p139, %p140
      %s142 = ssub.s32 %s21, %s33
      %s143 = ssub.s32 %s22, %s29
      %s144 = sor.u32 %s142, %s143
      %p145 = scmp.eq.s32.totalorder %s144, 0
      %s147 = sadd.s32 %s146, 1
      %s148 = scalar_select %p145, %s146, %s147
      %p151 = pneg %p145
      %p152 = scmp.eq.s32.totalorder %s14, 1
      %p153 = por %p151, %p152
      %p154 = scmp.ne.s32.totalorder %s146, %s149
      %p155 = scmp.eq.s32.totalorder %s14, 0
      %p156 = por %p154, %p155
      %p157 = scmp.ne.s32.totalorder %s146, %s149
      %p158 = scmp.eq.s32.totalorder %s19, 1
      %p159 = por %p157, %p158
      %p160 = scmp.ne.s32.totalorder %s149, %s150
      %p161 = scmp.eq.s32.totalorder %s19, 0
      %p162 = por %p160, %p161
      %p163 = scmp.ne.s32.totalorder %s149, %s150
      %p164 = scmp.eq.s32.totalorder %s20, 1
      %p165 = por %p163, %p164
      %p167 = scmp.ne.s32.totalorder %s150, %s166
      %p168 = scmp.eq.s32.totalorder %s20, 0
      %p169 = por %p167, %p168
      %p170 = scmp.le.s32.totalorder 1, %s14
      %p171 = scmp.lt.s32.totalorder %s14, 3
      %p172 = pnand %p170, %p171
      %p173 = pneg %p172
      // Predicated region
      $region9: #{sdpa_pallas.1} parent=5 // pred_check
        _
      $region10: #{sdpa_pallas.1} parent=5 // pred_check_branch
        %175 = sbr.rel (%p172) target = $region12
      $region11: #{sdpa_pallas.1} parent=5 // pred_region
        %s176 = ssub.s32 %s14, 1
      $region12: #{sdpa_pallas.1} parent=5 // pred_fallthru
        _
      %p177 = scmp.lt.s32.totalorder %s14, 2
      // Predicated region
      $region13: #{sdpa_pallas.1} parent=5 // pred_check
        %p178 = pneg %p177
      $region14: #{sdpa_pallas.1} parent=5 // pred_check_branch
        %180 = sbr.rel (%p178) target = $region16
      $region15: #{sdpa_pallas.1} parent=5 // pred_region
        // Predicated region
        $region17: #{sdpa_pallas.1} parent=15 // pred_check
          %p181 = pneg %p48
        $region18: #{sdpa_pallas.1} parent=15 // pred_check_branch
          %183 = sbr.rel (%p181) target = $region20
        $region19: #{sdpa_pallas.1} parent=15 // pred_region
          %s184 = smul.u32 16, %s22
          %p185 = scmp.lt.s32.totalorder %s21, 1
          %s186 = scalar_select %p185, %s21, 1
          %p187 = scmp.lt.s32.totalorder %s184, 15
          %s188 = scalar_select %p187, %s184, 15
          %s189 = smul.addr %s186, 16
          %s190 = sadd.s32 %s188, %s189
          %s191 = smul.addr %s190, 8
          %s192 = scalar_lea.vmem %s0, %s191
          %s193 = smul.u32 16, %s22
        $region20: #{sdpa_pallas.1} parent=15 // pred_fallthru
          _
        // Predicated region
        $region21: #{sdpa_pallas.1} parent=15 // pred_check
          %p194 = pneg %p74
        $region22: #{sdpa_pallas.1} parent=15 // pred_check_branch
          %196 = sbr.rel (%p194) target = $region24
        $region23: #{sdpa_pallas.1} parent=15 // pred_region
          %p197 = scmp.lt.s32.totalorder %s21, 1
          %s198 = scalar_select %p197, %s21, 1
          %s199 = smul.addr %s198, 16
          %s200 = smul.addr %s199, 8
          %s201 = scalar_lea.vmem %s1, %s200
        $region24: #{sdpa_pallas.1} parent=15 // pred_fallthru
          _
        // Predicated region
        $region25: #{sdpa_pallas.1} parent=15 // pred_check
          %p202 = pneg %p100
        $region26: #{sdpa_pallas.1} parent=15 // pred_check_branch
          %204 = sbr.rel (%p202) target = $region28
        $region27: #{sdpa_pallas.1} parent=15 // pred_region
          %p205 = scmp.lt.s32.totalorder %s21, 1
          %s206 = scalar_select %p205, %s21, 1
          %s207 = smul.addr %s206, 16
          %s208 = smul.addr %s207, 8
          %s209 = scalar_lea.vmem %s2, %s208
        $region28: #{sdpa_pallas.1} parent=15 // pred_fallthru
          _
      $region16: #{sdpa_pallas.1} parent=5 // pred_fallthru
        _
      %p210 = scmp.le.s32.totalorder 1, %s14
      %p211 = scmp.lt.s32.totalorder %s14, 3
      %p212 = pnand %p210, %p211
      %p213 = pneg %p212
      // Predicated region
      $region29: #{sdpa_pallas.1} parent=5 // pred_check
        _
      $region30: #{sdpa_pallas.1} parent=5 // pred_check_branch
        %215 = sbr.rel (%p212) target = $region32
      $region31: #{sdpa_pallas.1} parent=5 // pred_region
        %s216 = ssub.s32 %s14, 1
        %s217 = smul.u32 16, %s24
        %p218 = scmp.lt.s32.totalorder %s23, 1
        %s219 = scalar_select %p218, %s23, 1
        %p220 = scmp.lt.s32.totalorder %s217, 15
        %s221 = scalar_select %p220, %s217, 15
        %s222 = smul.addr %s219, 16
        %s223 = sadd.s32 %s221, %s222
        %s224 = smul.addr %s223, 8
        %s225 = scalar_lea.vmem %s0, %s224
        %p226 = pneg %p54
        %p227 = pneg %p51
        %p228 = scmp.lt.s32.totalorder %s23, 1
        %s229 = scalar_select %p228, %s23, 1
        %s230 = smul.addr %s229, 16
        %s231 = smul.addr %s230, 8
        %s232 = scalar_lea.vmem %s1, %s231
        %p233 = pneg %p80
        %p234 = pneg %p77
        %p235 = scmp.lt.s32.totalorder %s23, 1
        %s236 = scalar_select %p235, %s23, 1
        %s237 = smul.addr %s236, 16
        %s238 = smul.addr %s237, 8
        %s239 = scalar_lea.vmem %s2, %s238
        %p240 = pneg %p106
        %p241 = pneg %p103
        %p242 = pneg %p134
        %p243 = pneg %p131
        %s244 = smul.u32 16, %s24
        %p245 = scmp.lt.s32.totalorder %s23, 1
        %s246 = scalar_select %p245, %s23, 1
        %p247 = scmp.lt.s32.totalorder %s244, 15
        %s248 = scalar_select %p247, %s244, 15
        %s249 = smul.addr %s246, 16
        %s250 = sadd.s32 %s248, %s249
        %s251 = smul.addr %s250, 8
        %s252 = scalar_lea.vmem %s3, %s251
        %p253 = pneg %p162
        %p254 = pneg %p159
        %s255 = sand.u32 %s149, 1
        %s256 = scalar_lea.sflag [#allocation3], %s255
        %s257 = sand.u32 %s149, 1
        %s258 = smul.addr %s257, 128
        %s259 = scalar_lea.vmem [#allocation2], %s258
        %s260 = smul.u32 16, %s24
        %p261 = scmp.lt.s32.totalorder %s23, 1
        %s262 = scalar_select %p261, %s23, 1
        %p263 = scmp.lt.s32.totalorder %s260, 15
        %s264 = scalar_select %p263, %s260, 15
        %s265 = smul.addr %s262, 16
        %s266 = sadd.s32 %s264, %s265
        %s267 = smul.addr %s266, 8
        %s268 = scalar_lea.vmem %s0, %s267
        %s269 = smul.u32 16, %s24
        %p270 = scmp.lt.s32.totalorder %s23, 1
        %s271 = scalar_select %p270, %s23, 1
        %s272 = smul.addr %s271, 16
        %s273 = smul.addr %s272, 8
        %s274 = scalar_lea.vmem %s1, %s273
        %p275 = scmp.lt.s32.totalorder %s23, 1
        %s276 = scalar_select %p275, %s23, 1
        %s277 = smul.addr %s276, 16
        %s278 = smul.addr %s277, 8
        %s279 = scalar_lea.vmem %s2, %s278
        %s280 = smul.u32 16, %s24
        %p281 = scmp.lt.s32.totalorder %s23, 1
        %s282 = scalar_select %p281, %s23, 1
        %p283 = scmp.lt.s32.totalorder %s280, 15
        %s284 = scalar_select %p283, %s280, 15
        %s285 = smul.addr %s282, 16
        %s286 = sadd.s32 %s284, %s285
        %s287 = smul.addr %s286, 8
        %s288 = scalar_lea.vmem %s3, %s287
        %s289 = smul.u32 16, %s24
        %s290 = smul.u32 16, %s24
        %v291 = vld [vmem:[%s268] sm:$0xff]
        %v292 = vld [vmem:[%s268 + $0x8] sm:$0xff]
        %v293 = vld [vmem:[%s268 + $0x10] sm:$0xff]
        %v294 = vld [vmem:[%s268 + $0x18] sm:$0xff]
        %v295 = vld [vmem:[%s268 + $0x20] sm:$0xff]
        %v296 = vld [vmem:[%s268 + $0x28] sm:$0xff]
        %v297 = vld [vmem:[%s268 + $0x30] sm:$0xff]
        %v298 = vld [vmem:[%s268 + $0x38] sm:$0xff]
        %v299 = vld [vmem:[%s268 + $0x40] sm:$0xff]
        %v300 = vld [vmem:[%s268 + $0x48] sm:$0xff]
        %v301 = vld [vmem:[%s268 + $0x50] sm:$0xff]
        %v302 = vld [vmem:[%s268 + $0x58] sm:$0xff]
        %v303 = vld [vmem:[%s268 + $0x60] sm:$0xff]
        %v304 = vld [vmem:[%s268 + $0x68] sm:$0xff]
        %v305 = vld [vmem:[%s268 + $0x70] sm:$0xff]
        %v306 = vld [vmem:[%s268 + $0x78] sm:$0xff]
        %v307 = vld [vmem:[%s274] sm:$0xff]
        %v308 = vld [vmem:[%s274 + $0x8] sm:$0xff]
        %v309 = vld [vmem:[%s274 + $0x10] sm:$0xff]
        %v310 = vld [vmem:[%s274 + $0x18] sm:$0xff]
        %v311 = vld [vmem:[%s274 + $0x20] sm:$0xff]
        %v312 = vld [vmem:[%s274 + $0x28] sm:$0xff]
        %v313 = vld [vmem:[%s274 + $0x30] sm:$0xff]
        %v314 = vld [vmem:[%s274 + $0x38] sm:$0xff]
        %v315 = vld [vmem:[%s274 + $0x40] sm:$0xff]
        %v316 = vld [vmem:[%s274 + $0x48] sm:$0xff]
        %v317 = vld [vmem:[%s274 + $0x50] sm:$0xff]
        %v318 = vld [vmem:[%s274 + $0x58] sm:$0xff]
        %v319 = vld [vmem:[%s274 + $0x60] sm:$0xff]
        %v320 = vld [vmem:[%s274 + $0x68] sm:$0xff]
        %v321 = vld [vmem:[%s274 + $0x70] sm:$0xff]
        %v322 = vld [vmem:[%s274 + $0x78] sm:$0xff]
        %vm323 = vcmask 261120
        %v325 = vsel %vm323, %v291, 0
        %v328 = vsel %vm323, %v292, 0
        %v331 = vsel %vm323, %v293, 0
        %v334 = vsel %vm323, %v294, 0
        %v337 = vsel %vm323, %v295, 0
        %v340 = vsel %vm323, %v296, 0
        %v343 = vsel %vm323, %v297, 0
        %v346 = vsel %vm323, %v298, 0
        %v349 = vsel %vm323, %v299, 0
        %v352 = vsel %vm323, %v300, 0
        %v355 = vsel %vm323, %v301, 0
        %v358 = vsel %vm323, %v302, 0
        %v361 = vsel %vm323, %v303, 0
        %v364 = vsel %vm323, %v304, 0
        %v367 = vsel %vm323, %v305, 0
        %v370 = vsel %vm323, %v306, 0
        %v373 = vsel %vm323, %v307, 0
        %v376 = vsel %vm323, %v308, 0
        %v379 = vsel %vm323, %v309, 0
        %v382 = vsel %vm323, %v310, 0
        %v385 = vsel %vm323, %v311, 0
        %v388 = vsel %vm323, %v312, 0
        %v391 = vsel %vm323, %v313, 0
        %v394 = vsel %vm323, %v314, 0
        %v397 = vsel %vm323, %v315, 0
        %v400 = vsel %vm323, %v316, 0
        %v403 = vsel %vm323, %v317, 0
        %v406 = vsel %vm323, %v318, 0
        %v409 = vsel %vm323, %v319, 0
        %v412 = vsel %vm323, %v320, 0
        %v415 = vsel %vm323, %v321, 0
        %v418 = vsel %vm323, %v322, 0
        %420 = vmatpush.xpose.msra.mxu0 %v418
        %421 = vmatpush.xpose.msra.mxu0 %v415
        %422 = vmatpush.xpose.msra.mxu0 %v412
        %423 = vmatpush.xpose.msra.mxu0 %v409
        %424 = vmatpush.xpose.msra.mxu0 %v406
        %425 = vmatpush.xpose.msra.mxu0 %v403
        %426 = vmatpush.xpose.msra.mxu0 %v400
        %427 = vmatpush.xpose.msra.mxu0 %v397
        %428 = vmatpush.xpose.msra.mxu0 %v394
        %429 = vmatpush.xpose.msra.mxu0 %v391
        %430 = vmatpush.xpose.msra.mxu0 %v388
        %431 = vmatpush.xpose.msra.mxu0 %v385
        %432 = vmatpush.xpose.msra.mxu0 %v382
        %433 = vmatpush.xpose.msra.mxu0 %v379
        %434 = vmatpush.xpose.msra.mxu0 %v376
        %435 = vmatpush.xpose.msra.mxu0 %v373
        %436 = vmatmul.f32.gmra.mxu0 %v325
        %v437 = vpop.f32.mrf.mxu0
        %v438 = vadd.f32 0.0, %v437
        %439 = vmatmul.f32.gmra.mxu0 %v328
        %v440 = vpop.f32.mrf.mxu0
        %v441 = vadd.f32 0.0, %v440
        %442 = vmatmul.f32.gmra.mxu0 %v331
        %v443 = vpop.f32.mrf.mxu0
        %v444 = vadd.f32 0.0, %v443
        %445 = vmatmul.f32.gmra.mxu0 %v334
        %v446 = vpop.f32.mrf.mxu0
        %v447 = vadd.f32 0.0, %v446
        %448 = vmatmul.f32.gmra.mxu0 %v337
        %v449 = vpop.f32.mrf.mxu0
        %v450 = vadd.f32 0.0, %v449
        %451 = vmatmul.f32.gmra.mxu0 %v340
        %v452 = vpop.f32.mrf.mxu0
        %v453 = vadd.f32 0.0, %v452
        %454 = vmatmul.f32.gmra.mxu0 %v343
        %v455 = vpop.f32.mrf.mxu0
        %v456 = vadd.f32 0.0, %v455
        %457 = vmatmul.f32.gmra.mxu0 %v346
        %v458 = vpop.f32.mrf.mxu0
        %v459 = vadd.f32 0.0, %v458
        %460 = vmatmul.f32.gmra.mxu0 %v349
        %v461 = vpop.f32.mrf.mxu0
        %v462 = vadd.f32 0.0, %v461
        %463 = vmatmul.f32.gmra.mxu0 %v352
        %v464 = vpop.f32.mrf.mxu0
        %v465 = vadd.f32 0.0, %v464
        %466 = vmatmul.f32.gmra.mxu0 %v355
        %v467 = vpop.f32.mrf.mxu0
        %v468 = vadd.f32 0.0, %v467
        %469 = vmatmul.f32.gmra.mxu0 %v358
        %v470 = vpop.f32.mrf.mxu0
        %v471 = vadd.f32 0.0, %v470
        %472 = vmatmul.f32.gmra.mxu0 %v361
        %v473 = vpop.f32.mrf.mxu0
        %v474 = vadd.f32 0.0, %v473
        %475 = vmatmul.f32.gmra.mxu0 %v364
        %v476 = vpop.f32.mrf.mxu0
        %v477 = vadd.f32 0.0, %v476
        %478 = vmatmul.f32.gmra.mxu0 %v367
        %v479 = vpop.f32.mrf.mxu0
        %v480 = vadd.f32 0.0, %v479
        %481 = vmatmul.f32.gmra.mxu0 %v370
        %v482 = vpop.f32.mrf.mxu0
        %v483 = vadd.f32 0.0, %v482
        %484 = vdwg.mxu0
        %v485 = vmul.f32 %v438, 0.17677669
        %v486 = vmul.f32 %v441, 0.17677669
        %v487 = vmul.f32 %v444, 0.17677669
        %v488 = vmul.f32 %v447, 0.17677669
        %v489 = vmul.f32 %v450, 0.17677669
        %v490 = vmul.f32 %v453, 0.17677669
        %v491 = vmul.f32 %v456, 0.17677669
        %v492 = vmul.f32 %v459, 0.17677669
        %v493 = vmul.f32 %v462, 0.17677669
        %v494 = vmul.f32 %v465, 0.17677669
        %v495 = vmul.f32 %v468, 0.17677669
        %v496 = vmul.f32 %v471, 0.17677669
        %v497 = vmul.f32 %v474, 0.17677669
        %v498 = vmul.f32 %v477, 0.17677669
        %v499 = vmul.f32 %v480, 0.17677669
        %v500 = vmul.f32 %v483, 0.17677669
        %501 = vmax.xlane.f32.xlu0 %v485
        %v502 = vpop.xlane.xlu0 %501
        %503 = vmax.xlane.f32.xlu0 %v486
        %v504 = vpop.xlane.xlu0 %503
        %505 = vmax.xlane.f32.xlu0 %v487
        %v506 = vpop.xlane.xlu0 %505
        %507 = vmax.xlane.f32.xlu0 %v488
        %v508 = vpop.xlane.xlu0 %507
        %509 = vmax.xlane.f32.xlu0 %v489
        %v510 = vpop.xlane.xlu0 %509
        %511 = vmax.xlane.f32.xlu0 %v490
        %v512 = vpop.xlane.xlu0 %511
        %513 = vmax.xlane.f32.xlu0 %v491
        %v514 = vpop.xlane.xlu0 %513
        %515 = vmax.xlane.f32.xlu0 %v492
        %v516 = vpop.xlane.xlu0 %515
        %517 = vmax.xlane.f32.xlu0 %v493
        %v518 = vpop.xlane.xlu0 %517
        %519 = vmax.xlane.f32.xlu0 %v494
        %v520 = vpop.xlane.xlu0 %519
        %521 = vmax.xlane.f32.xlu0 %v495
        %v522 = vpop.xlane.xlu0 %521
        %523 = vmax.xlane.f32.xlu0 %v496
        %v524 = vpop.xlane.xlu0 %523
        %525 = vmax.xlane.f32.xlu0 %v497
        %v526 = vpop.xlane.xlu0 %525
        %527 = vmax.xlane.f32.xlu0 %v498
        %v528 = vpop.xlane.xlu0 %527
        %529 = vmax.xlane.f32.xlu0 %v499
        %v530 = vpop.xlane.xlu0 %529
        %531 = vmax.xlane.f32.xlu0 %v500
        %v532 = vpop.xlane.xlu0 %531
        %v533 = vsub.f32 %v485, %v502
        %v534 = vsub.f32 %v486, %v504
        %v535 = vsub.f32 %v487, %v506
        %v536 = vsub.f32 %v488, %v508
        %v537 = vsub.f32 %v489, %v510
        %v538 = vsub.f32 %v490, %v512
        %v539 = vsub.f32 %v491, %v514
        %v540 = vsub.f32 %v492, %v516
        %v541 = vsub.f32 %v493, %v518
        %v542 = vsub.f32 %v494, %v520
        %v543 = vsub.f32 %v495, %v522
        %v544 = vsub.f32 %v496, %v524
        %v545 = vsub.f32 %v497, %v526
        %v546 = vsub.f32 %v498, %v528
        %v547 = vsub.f32 %v499, %v530
        %v548 = vsub.f32 %v500, %v532
        %v549 = vmul.f32 %v533, 1.442695
        %v550 = vpow.pop %v549
        %v551 = vmul.f32 %v534, 1.442695
        %v552 = vpow.pop %v551
        %v553 = vmul.f32 %v535, 1.442695
        %v554 = vpow.pop %v553
        %v555 = vmul.f32 %v536, 1.442695
        %v556 = vpow.pop %v555
        %v557 = vmul.f32 %v537, 1.442695
        %v558 = vpow.pop %v557
        %v559 = vmul.f32 %v538, 1.442695
        %v560 = vpow.pop %v559
        %v561 = vmul.f32 %v539, 1.442695
        %v562 = vpow.pop %v561
        %v563 = vmul.f32 %v540, 1.442695
        %v564 = vpow.pop %v563
        %v565 = vmul.f32 %v541, 1.442695
        %v566 = vpow.pop %v565
        %v567 = vmul.f32 %v542, 1.442695
        %v568 = vpow.pop %v567
        %v569 = vmul.f32 %v543, 1.442695
        %v570 = vpow.pop %v569
        %v571 = vmul.f32 %v544, 1.442695
        %v572 = vpow.pop %v571
        %v573 = vmul.f32 %v545, 1.442695
        %v574 = vpow.pop %v573
        %v575 = vmul.f32 %v546, 1.442695
        %v576 = vpow.pop %v575
        %v577 = vmul.f32 %v547, 1.442695
        %v578 = vpow.pop %v577
        %v579 = vmul.f32 %v548, 1.442695
        %v580 = vpow.pop %v579
        %581 = vadd.xlane.f32.xlu0 %v550
        %v582 = vpop.xlane.xlu0 %581
        %583 = vadd.xlane.f32.xlu0 %v552
        %v584 = vpop.xlane.xlu0 %583
        %585 = vadd.xlane.f32.xlu0 %v554
        %v586 = vpop.xlane.xlu0 %585
        %587 = vadd.xlane.f32.xlu0 %v556
        %v588 = vpop.xlane.xlu0 %587
        %589 = vadd.xlane.f32.xlu0 %v558
        %v590 = vpop.xlane.xlu0 %589
        %591 = vadd.xlane.f32.xlu0 %v560
        %v592 = vpop.xlane.xlu0 %591
        %593 = vadd.xlane.f32.xlu0 %v562
        %v594 = vpop.xlane.xlu0 %593
        %595 = vadd.xlane.f32.xlu0 %v564
        %v596 = vpop.xlane.xlu0 %595
        %597 = vadd.xlane.f32.xlu0 %v566
        %v598 = vpop.xlane.xlu0 %597
        %599 = vadd.xlane.f32.xlu0 %v568
        %v600 = vpop.xlane.xlu0 %599
        %601 = vadd.xlane.f32.xlu0 %v570
        %v602 = vpop.xlane.xlu0 %601
        %603 = vadd.xlane.f32.xlu0 %v572
        %v604 = vpop.xlane.xlu0 %603
        %605 = vadd.xlane.f32.xlu0 %v574
        %v606 = vpop.xlane.xlu0 %605
        %607 = vadd.xlane.f32.xlu0 %v576
        %v608 = vpop.xlane.xlu0 %607
        %609 = vadd.xlane.f32.xlu0 %v578
        %v610 = vpop.xlane.xlu0 %609
        %611 = vadd.xlane.f32.xlu0 %v580
        %v612 = vpop.xlane.xlu0 %611
        %v613 = vrcp.pop %v582
        %v614 = vmul.f32 %v582, %v613
        %v615 = vsub.f32 1.0, %v614
        %v616 = vmul.f32 %v613, %v615
        %v617 = vadd.f32 %v613, %v616
        %vm618 = vweird.f32 %v582
        %vm619 = vweird.f32 %v613
        %vm620 = vmor %vm618, %vm619
        %v621 = vsel %vm620, %v613, %v617
        %v622 = vand.u32 2147483647, %v582
        %vm623 = vcmp.eq.f32.partialorder %v622, 8.507059e+37
        %v624 = vand.u32 %v582, 2147483648
        %v625 = vor.u32 1.1754944e-38, %v624
        %v626 = vsel %vm623, %v625, %v621
        %v627 = vmul.f32 %v550, %v626
        %v628 = vrcp.pop %v584
        %v629 = vmul.f32 %v584, %v628
        %v630 = vsub.f32 1.0, %v629
        %v631 = vmul.f32 %v628, %v630
        %v632 = vadd.f32 %v628, %v631
        %vm633 = vweird.f32 %v584
        %vm634 = vweird.f32 %v628
        %vm635 = vmor %vm633, %vm634
        %v636 = vsel %vm635, %v628, %v632
        %v637 = vand.u32 2147483647, %v584
        %vm638 = vcmp.eq.f32.partialorder %v637, 8.507059e+37
        %v639 = vand.u32 %v584, 2147483648
        %v640 = vor.u32 1.1754944e-38, %v639
        %v641 = vsel %vm638, %v640, %v636
        %v642 = vmul.f32 %v552, %v641
        %v643 = vrcp.pop %v586
        %v644 = vmul.f32 %v586, %v643
        %v645 = vsub.f32 1.0, %v644
        %v646 = vmul.f32 %v643, %v645
        %v647 = vadd.f32 %v643, %v646
        %vm648 = vweird.f32 %v586
        %vm649 = vweird.f32 %v643
        %vm650 = vmor %vm648, %vm649
        %v651 = vsel %vm650, %v643, %v647
        %v652 = vand.u32 2147483647, %v586
        %vm653 = vcmp.eq.f32.partialorder %v652, 8.507059e+37
        %v654 = vand.u32 %v586, 2147483648
        %v655 = vor.u32 1.1754944e-38, %v654
        %v656 = vsel %vm653, %v655, %v651
        %v657 = vmul.f32 %v554, %v656
        %v658 = vrcp.pop %v588
        %v659 = vmul.f32 %v588, %v658
        %v660 = vsub.f32 1.0, %v659
        %v661 = vmul.f32 %v658, %v660
        %v662 = vadd.f32 %v658, %v661
        %vm663 = vweird.f32 %v588
        %vm664 = vweird.f32 %v658
        %vm665 = vmor %vm663, %vm664
        %v666 = vsel %vm665, %v658, %v662
        %v667 = vand.u32 2147483647, %v588
        %vm668 = vcmp.eq.f32.partialorder %v667, 8.507059e+37
        %v669 = vand.u32 %v588, 2147483648
        %v670 = vor.u32 1.1754944e-38, %v669
        %v671 = vsel %vm668, %v670, %v666
        %v672 = vmul.f32 %v556, %v671
        %v673 = vrcp.pop %v590
        %v674 = vmul.f32 %v590, %v673
        %v675 = vsub.f32 1.0, %v674
        %v676 = vmul.f32 %v673, %v675
        %v677 = vadd.f32 %v673, %v676
        %vm678 = vweird.f32 %v590
        %vm679 = vweird.f32 %v673
        %vm680 = vmor %vm678, %vm679
        %v681 = vsel %vm680, %v673, %v677
        %v682 = vand.u32 2147483647, %v590
        %vm683 = vcmp.eq.f32.partialorder %v682, 8.507059e+37
        %v684 = vand.u32 %v590, 2147483648
        %v685 = vor.u32 1.1754944e-38, %v684
        %v686 = vsel %vm683, %v685, %v681
        %v687 = vmul.f32 %v558, %v686
        %v688 = vrcp.pop %v592
        %v689 = vmul.f32 %v592, %v688
        %v690 = vsub.f32 1.0, %v689
        %v691 = vmul.f32 %v688, %v690
        %v692 = vadd.f32 %v688, %v691
        %vm693 = vweird.f32 %v592
        %vm694 = vweird.f32 %v688
        %vm695 = vmor %vm693, %vm694
        %v696 = vsel %vm695, %v688, %v692
        %v697 = vand.u32 2147483647, %v592
        %vm698 = vcmp.eq.f32.partialorder %v697, 8.507059e+37
        %v699 = vand.u32 %v592, 2147483648
        %v700 = vor.u32 1.1754944e-38, %v699
        %v701 = vsel %vm698, %v700, %v696
        %v702 = vmul.f32 %v560, %v701
        %v703 = vrcp.pop %v594
        %v704 = vmul.f32 %v594, %v703
        %v705 = vsub.f32 1.0, %v704
        %v706 = vmul.f32 %v703, %v705
        %v707 = vadd.f32 %v703, %v706
        %vm708 = vweird.f32 %v594
        %vm709 = vweird.f32 %v703
        %vm710 = vmor %vm708, %vm709
        %v711 = vsel %vm710, %v703, %v707
        %v712 = vand.u32 2147483647, %v594
        %vm713 = vcmp.eq.f32.partialorder %v712, 8.507059e+37
        %v714 = vand.u32 %v594, 2147483648
        %v715 = vor.u32 1.1754944e-38, %v714
        %v716 = vsel %vm713, %v715, %v711
        %v717 = vmul.f32 %v562, %v716
        %v718 = vrcp.pop %v596
        %v719 = vmul.f32 %v596, %v718
        %v720 = vsub.f32 1.0, %v719
        %v721 = vmul.f32 %v718, %v720
        %v722 = vadd.f32 %v718, %v721
        %vm723 = vweird.f32 %v596
        %vm724 = vweird.f32 %v718
        %vm725 = vmor %vm723, %vm724
        %v726 = vsel %vm725, %v718, %v722
        %v727 = vand.u32 2147483647, %v596
        %vm728 = vcmp.eq.f32.partialorder %v727, 8.507059e+37
        %v729 = vand.u32 %v596, 2147483648
        %v730 = vor.u32 1.1754944e-38, %v729
        %v731 = vsel %vm728, %v730, %v726
        %v732 = vmul.f32 %v564, %v731
        %v733 = vrcp.pop %v598
        %v734 = vmul.f32 %v598, %v733
        %v735 = vsub.f32 1.0, %v734
        %v736 = vmul.f32 %v733, %v735
        %v737 = vadd.f32 %v733, %v736
        %vm738 = vweird.f32 %v598
        %vm739 = vweird.f32 %v733
        %vm740 = vmor %vm738, %vm739
        %v741 = vsel %vm740, %v733, %v737
        %v742 = vand.u32 2147483647, %v598
        %vm743 = vcmp.eq.f32.partialorder %v742, 8.507059e+37
        %v744 = vand.u32 %v598, 2147483648
        %v745 = vor.u32 1.1754944e-38, %v744
        %v746 = vsel %vm743, %v745, %v741
        %v747 = vmul.f32 %v566, %v746
        %v748 = vrcp.pop %v600
        %v749 = vmul.f32 %v600, %v748
        %v750 = vsub.f32 1.0, %v749
        %v751 = vmul.f32 %v748, %v750
        %v752 = vadd.f32 %v748, %v751
        %vm753 = vweird.f32 %v600
        %vm754 = vweird.f32 %v748
        %vm755 = vmor %vm753, %vm754
        %v756 = vsel %vm755, %v748, %v752
        %v757 = vand.u32 2147483647, %v600
        %vm758 = vcmp.eq.f32.partialorder %v757, 8.507059e+37
        %v759 = vand.u32 %v600, 2147483648
        %v760 = vor.u32 1.1754944e-38, %v759
        %v761 = vsel %vm758, %v760, %v756
        %v762 = vmul.f32 %v568, %v761
        %v763 = vrcp.pop %v602
        %v764 = vmul.f32 %v602, %v763
        %v765 = vsub.f32 1.0, %v764
        %v766 = vmul.f32 %v763, %v765
        %v767 = vadd.f32 %v763, %v766
        %vm768 = vweird.f32 %v602
        %vm769 = vweird.f32 %v763
        %vm770 = vmor %vm768, %vm769
        %v771 = vsel %vm770, %v763, %v767
        %v772 = vand.u32 2147483647, %v602
        %vm773 = vcmp.eq.f32.partialorder %v772, 8.507059e+37
        %v774 = vand.u32 %v602, 2147483648
        %v775 = vor.u32 1.1754944e-38, %v774
        %v776 = vsel %vm773, %v775, %v771
        %v777 = vmul.f32 %v570, %v776
        %v778 = vrcp.pop %v604
        %v779 = vmul.f32 %v604, %v778
        %v780 = vsub.f32 1.0, %v779
        %v781 = vmul.f32 %v778, %v780
        %v782 = vadd.f32 %v778, %v781
        %vm783 = vweird.f32 %v604
        %vm784 = vweird.f32 %v778
        %vm785 = vmor %vm783, %vm784
        %v786 = vsel %vm785, %v778, %v782
        %v787 = vand.u32 2147483647, %v604
        %vm788 = vcmp.eq.f32.partialorder %v787, 8.507059e+37
        %v789 = vand.u32 %v604, 2147483648
        %v790 = vor.u32 1.1754944e-38, %v789
        %v791 = vsel %vm788, %v790, %v786
        %v792 = vmul.f32 %v572, %v791
        %v793 = vrcp.pop %v606
        %v794 = vmul.f32 %v606, %v793
        %v795 = vsub.f32 1.0, %v794
        %v796 = vmul.f32 %v793, %v795
        %v797 = vadd.f32 %v793, %v796
        %vm798 = vweird.f32 %v606
        %vm799 = vweird.f32 %v793
        %vm800 = vmor %vm798, %vm799
        %v801 = vsel %vm800, %v793, %v797
        %v802 = vand.u32 2147483647, %v606
        %vm803 = vcmp.eq.f32.partialorder %v802, 8.507059e+37
        %v804 = vand.u32 %v606, 2147483648
        %v805 = vor.u32 1.1754944e-38, %v804
        %v806 = vsel %vm803, %v805, %v801
        %v807 = vmul.f32 %v574, %v806
        %v808 = vrcp.pop %v608
        %v809 = vmul.f32 %v608, %v808
        %v810 = vsub.f32 1.0, %v809
        %v811 = vmul.f32 %v808, %v810
        %v812 = vadd.f32 %v808, %v811
        %vm813 = vweird.f32 %v608
        %vm814 = vweird.f32 %v808
        %vm815 = vmor %vm813, %vm814
        %v816 = vsel %vm815, %v808, %v812
        %v817 = vand.u32 2147483647, %v608
        %vm818 = vcmp.eq.f32.partialorder %v817, 8.507059e+37
        %v819 = vand.u32 %v608, 2147483648
        %v820 = vor.u32 1.1754944e-38, %v819
        %v821 = vsel %vm818, %v820, %v816
        %v822 = vmul.f32 %v576, %v821
        %v823 = vrcp.pop %v610
        %v824 = vmul.f32 %v610, %v823
        %v825 = vsub.f32 1.0, %v824
        %v826 = vmul.f32 %v823, %v825
        %v827 = vadd.f32 %v823, %v826
        %vm828 = vweird.f32 %v610
        %vm829 = vweird.f32 %v823
        %vm830 = vmor %vm828, %vm829
        %v831 = vsel %vm830, %v823, %v827
        %v832 = vand.u32 2147483647, %v610
        %vm833 = vcmp.eq.f32.partialorder %v832, 8.507059e+37
        %v834 = vand.u32 %v610, 2147483648
        %v835 = vor.u32 1.1754944e-38, %v834
        %v836 = vsel %vm833, %v835, %v831
        %v837 = vmul.f32 %v578, %v836
        %v838 = vrcp.pop %v612
        %v839 = vmul.f32 %v612, %v838
        %v840 = vsub.f32 1.0, %v839
        %v841 = vmul.f32 %v838, %v840
        %v842 = vadd.f32 %v838, %v841
        %vm843 = vweird.f32 %v612
        %vm844 = vweird.f32 %v838
        %vm845 = vmor %vm843, %vm844
        %v846 = vsel %vm845, %v838, %v842
        %v847 = vand.u32 2147483647, %v612
        %vm848 = vcmp.eq.f32.partialorder %v847, 8.507059e+37
        %v849 = vand.u32 %v612, 2147483648
        %v850 = vor.u32 1.1754944e-38, %v849
        %v851 = vsel %vm848, %v850, %v846
        %v852 = vmul.f32 %v580, %v851
        %853 = vst [vmem:[%s259] sm:$0xff] %v627
        %854 = vst [vmem:[%s259 + $0x8] sm:$0xff] %v642
        %855 = vst [vmem:[%s259 + $0x10] sm:$0xff] %v657
        %856 = vst [vmem:[%s259 + $0x18] sm:$0xff] %v672
        %857 = vst [vmem:[%s259 + $0x20] sm:$0xff] %v687
        %858 = vst [vmem:[%s259 + $0x28] sm:$0xff] %v702
        %859 = vst [vmem:[%s259 + $0x30] sm:$0xff] %v717
        %860 = vst [vmem:[%s259 + $0x38] sm:$0xff] %v732
        %861 = vst [vmem:[%s259 + $0x40] sm:$0xff] %v747
        %862 = vst [vmem:[%s259 + $0x48] sm:$0xff] %v762
        %863 = vst [vmem:[%s259 + $0x50] sm:$0xff] %v777
        %864 = vst [vmem:[%s259 + $0x58] sm:$0xff] %v792
        %865 = vst [vmem:[%s259 + $0x60] sm:$0xff] %v807
        %866 = vst [vmem:[%s259 + $0x68] sm:$0xff] %v822
        %867 = vst [vmem:[%s259 + $0x70] sm:$0xff] %v837
        %868 = vst [vmem:[%s259 + $0x78] sm:$0xff] %v852
        %v869 = vld [vmem:[%s279] sm:$0xff]
        %v870 = vld [vmem:[%s279 + $0x8] sm:$0xff]
        %v871 = vld [vmem:[%s279 + $0x10] sm:$0xff]
        %v872 = vld [vmem:[%s279 + $0x18] sm:$0xff]
        %v873 = vld [vmem:[%s279 + $0x20] sm:$0xff]
        %v874 = vld [vmem:[%s279 + $0x28] sm:$0xff]
        %v875 = vld [vmem:[%s279 + $0x30] sm:$0xff]
        %v876 = vld [vmem:[%s279 + $0x38] sm:$0xff]
        %v877 = vld [vmem:[%s279 + $0x40] sm:$0xff]
        %v878 = vld [vmem:[%s279 + $0x48] sm:$0xff]
        %v879 = vld [vmem:[%s279 + $0x50] sm:$0xff]
        %v880 = vld [vmem:[%s279 + $0x58] sm:$0xff]
        %v881 = vld [vmem:[%s279 + $0x60] sm:$0xff]
        %v882 = vld [vmem:[%s279 + $0x68] sm:$0xff]
        %v883 = vld [vmem:[%s279 + $0x70] sm:$0xff]
        %v884 = vld [vmem:[%s279 + $0x78] sm:$0xff]
        %885 = vmatpush.msra.mxu0 %v884
        %886 = vmatpush.msra.mxu0 %v883
        %887 = vmatpush.msra.mxu0 %v882
        %888 = vmatpush.msra.mxu0 %v881
        %889 = vmatpush.msra.mxu0 %v880
        %890 = vmatpush.msra.mxu0 %v879
        %891 = vmatpush.msra.mxu0 %v878
        %892 = vmatpush.msra.mxu0 %v877
        %893 = vmatpush.msra.mxu0 %v876
        %894 = vmatpush.msra.mxu0 %v875
        %895 = vmatpush.msra.mxu0 %v874
        %896 = vmatpush.msra.mxu0 %v873
        %897 = vmatpush.msra.mxu0 %v872
        %898 = vmatpush.msra.mxu0 %v871
        %899 = vmatpush.msra.mxu0 %v870
        %900 = vmatpush.msra.mxu0 %v869
        %901 = vmatmul.f32.gmra.mxu0 %v627
        %v902 = vpop.f32.mrf.mxu0
        %v903 = vadd.f32 0.0, %v902
        %904 = vmatmul.f32.gmra.mxu0 %v642
        %v905 = vpop.f32.mrf.mxu0
        %v906 = vadd.f32 0.0, %v905
        %907 = vmatmul.f32.gmra.mxu0 %v657
        %v908 = vpop.f32.mrf.mxu0
        %v909 = vadd.f32 0.0, %v908
        %910 = vmatmul.f32.gmra.mxu0 %v672
        %v911 = vpop.f32.mrf.mxu0
        %v912 = vadd.f32 0.0, %v911
        %913 = vmatmul.f32.gmra.mxu0 %v687
        %v914 = vpop.f32.mrf.mxu0
        %v915 = vadd.f32 0.0, %v914
        %916 = vmatmul.f32.gmra.mxu0 %v702
        %v917 = vpop.f32.mrf.mxu0
        %v918 = vadd.f32 0.0, %v917
        %919 = vmatmul.f32.gmra.mxu0 %v717
        %v920 = vpop.f32.mrf.mxu0
        %v921 = vadd.f32 0.0, %v920
        %922 = vmatmul.f32.gmra.mxu0 %v732
        %v923 = vpop.f32.mrf.mxu0
        %v924 = vadd.f32 0.0, %v923
        %925 = vmatmul.f32.gmra.mxu0 %v747
        %v926 = vpop.f32.mrf.mxu0
        %v927 = vadd.f32 0.0, %v926
        %928 = vmatmul.f32.gmra.mxu0 %v762
        %v929 = vpop.f32.mrf.mxu0
        %v930 = vadd.f32 0.0, %v929
        %931 = vmatmul.f32.gmra.mxu0 %v777
        %v932 = vpop.f32.mrf.mxu0
        %v933 = vadd.f32 0.0, %v932
        %934 = vmatmul.f32.gmra.mxu0 %v792
        %v935 = vpop.f32.mrf.mxu0
        %v936 = vadd.f32 0.0, %v935
        %937 = vmatmul.f32.gmra.mxu0 %v807
        %v938 = vpop.f32.mrf.mxu0
        %v939 = vadd.f32 0.0, %v938
        %940 = vmatmul.f32.gmra.mxu0 %v822
        %v941 = vpop.f32.mrf.mxu0
        %v942 = vadd.f32 0.0, %v941
        %943 = vmatmul.f32.gmra.mxu0 %v837
        %v944 = vpop.f32.mrf.mxu0
        %v945 = vadd.f32 0.0, %v944
        %946 = vmatmul.f32.gmra.mxu0 %v852
        %v947 = vpop.f32.mrf.mxu0
        %v948 = vadd.f32 0.0, %v947
        %949 = vdwg.mxu0
        %950 = vst.msk [vmem:[%s288] sm:$0xff] %vm323, %v903
        %951 = vst.msk [vmem:[%s288 + $0x8] sm:$0xff] %vm323, %v906
        %952 = vst.msk [vmem:[%s288 + $0x10] sm:$0xff] %vm323, %v909
        %953 = vst.msk [vmem:[%s288 + $0x18] sm:$0xff] %vm323, %v912
        %954 = vst.msk [vmem:[%s288 + $0x20] sm:$0xff] %vm323, %v915
        %955 = vst.msk [vmem:[%s288 + $0x28] sm:$0xff] %vm323, %v918
        %956 = vst.msk [vmem:[%s288 + $0x30] sm:$0xff] %vm323, %v921
        %957 = vst.msk [vmem:[%s288 + $0x38] sm:$0xff] %vm323, %v924
        %958 = vst.msk [vmem:[%s288 + $0x40] sm:$0xff] %vm323, %v927
        %959 = vst.msk [vmem:[%s288 + $0x48] sm:$0xff] %vm323, %v930
        %960 = vst.msk [vmem:[%s288 + $0x50] sm:$0xff] %vm323, %v933
        %961 = vst.msk [vmem:[%s288 + $0x58] sm:$0xff] %vm323, %v936
        %962 = vst.msk [vmem:[%s288 + $0x60] sm:$0xff] %vm323, %v939
        %963 = vst.msk [vmem:[%s288 + $0x68] sm:$0xff] %vm323, %v942
        %964 = vst.msk [vmem:[%s288 + $0x70] sm:$0xff] %vm323, %v945
        %965 = vst.msk [vmem:[%s288 + $0x78] sm:$0xff] %vm323, %v948
        %s966 = smul.u32 16, %s24
        %p967 = scmp.lt.s32.totalorder %s23, 1
        %s968 = scalar_select %p967, %s23, 1
        %p969 = scmp.lt.s32.totalorder %s966, 15
        %s970 = scalar_select %p969, %s966, 15
        %s971 = smul.addr %s968, 16
        %s972 = sadd.s32 %s970, %s971
        %s973 = smul.addr %s972, 8
        %s974 = scalar_lea.vmem %s3, %s973
        %s975 = sand.u32 %s149, 1
        %s976 = scalar_lea.sflag [#allocation3], %s975
        %s977 = sand.u32 %s149, 1
        %s978 = smul.addr %s977, 128
        %s979 = scalar_lea.vmem [#allocation2], %s978
        // Predicated region
        $region33: #{sdpa_pallas.1} parent=31 // pred_check
          %p980 = pneg %p131
        $region34: #{sdpa_pallas.1} parent=31 // pred_check_branch
          %982 = sbr.rel (%p980) target = $region36
        $region35: #{sdpa_pallas.1} parent=31 // pred_region
          %s983 = smul.u32 16, %s24
        $region36: #{sdpa_pallas.1} parent=31 // pred_fallthru
          _
        // Predicated region
        $region37: #{sdpa_pallas.1} parent=31 // pred_check
          %p984 = pneg %p159
        $region38: #{sdpa_pallas.1} parent=31 // pred_check_branch
          %986 = sbr.rel (%p984) target = $region40
        $region39: #{sdpa_pallas.1} parent=31 // pred_region
          %s987 = smul.u32 16, %s24
          %989 = vsyncadd %s976, 0
          %s990 = smul.addr %s23, 16
          %s991 = sadd.s32 %s987, %s990
          %s992 = smul.addr %s991, 8
          %s993 = scalar_lea.hbm %s4, %s992
          %s994 = sshll.u32 %s979, 4
          %s995 = int_to_ptr.vmem [resolvable:$true] %s994
          %s996 = sshll.u32 %s993, 4
          %s997 = int_to_ptr.hbm [resolvable:$true] %s996
          %1002 = dma.vmem_to_hbm [thread:$0]  %s995, 2048, %s997, %s976, 128, 128, 8
        $region40: #{sdpa_pallas.1} parent=31 // pred_fallthru
          _
      $region32: #{sdpa_pallas.1} parent=5 // pred_fallthru
        _
      %p1003 = scmp.le.s32.totalorder 2, %s14
      // Predicated region
      $region41: #{sdpa_pallas.1} parent=5 // pred_check
        %p1004 = pneg %p1003
      $region42: #{sdpa_pallas.1} parent=5 // pred_check_branch
        %1006 = sbr.rel (%p1004) target = $region44
      $region43: #{sdpa_pallas.1} parent=5 // pred_region
        %s1007 = ssub.s32 %s14, 2
        // Predicated region
        $region45: #{sdpa_pallas.1} parent=43 // pred_check
          %p1008 = pneg %p137
        $region46: #{sdpa_pallas.1} parent=43 // pred_check_branch
          %1010 = sbr.rel (%p1008) target = $region48
        $region47: #{sdpa_pallas.1} parent=43 // pred_region
          %s1011 = smul.u32 16, %s26
          %p1012 = scmp.lt.s32.totalorder %s25, 1
          %s1013 = scalar_select %p1012, %s25, 1
          %p1014 = scmp.lt.s32.totalorder %s1011, 15
          %s1015 = scalar_select %p1014, %s1011, 15
          %s1016 = smul.addr %s1013, 16
          %s1017 = sadd.s32 %s1015, %s1016
          %s1018 = smul.addr %s1017, 8
          %s1019 = scalar_lea.vmem %s3, %s1018
        $region48: #{sdpa_pallas.1} parent=43 // pred_fallthru
          _
        // Predicated region
        $region49: #{sdpa_pallas.1} parent=43 // pred_check
          %p1020 = pneg %p165
        $region50: #{sdpa_pallas.1} parent=43 // pred_check_branch
          %1022 = sbr.rel (%p1020) target = $region52
        $region51: #{sdpa_pallas.1} parent=43 // pred_region
          %s1023 = sand.u32 %s150, 1
          %s1024 = scalar_lea.sflag [#allocation3], %s1023
          %s1025 = sand.u32 %s150, 1
          %s1026 = smul.addr %s1025, 128
          %s1027 = scalar_lea.vmem [#allocation2], %s1026
          %1029 = dma.done %s1024, 2048
        $region52: #{sdpa_pallas.1} parent=43 // pred_fallthru
          _
      $region44: #{sdpa_pallas.1} parent=5 // pred_fallthru
        _
    $region6: #{sdpa_pallas.1} parent=1 // loop_footer
      %s18 = sadd.s32 1, %s14
    $region7: #{sdpa_pallas.1} parent=1 // loop_footer_branch
      %13 = sbr.rel target = $region3
    $region8: #{sdpa_pallas.1} parent=1 // loop_exit
      _
    %1030 = vsyncpa [#allocation3], 1
    %s1031 = scalar_lea.sflag [#allocation3], 1
    %1032 = vsyncpa %s1031, 1

</llo_original>
